<compile_context>
chip_gen: v7x
topology: tpu7x:2x2x1
jax: 0.10.0
libtpu: 0.0.40
codegen_flags: <defaults>
</compile_context>

<pallas_src>
import numpy as np
import jax
import jax.numpy as jnp
from jax import lax
from jax.experimental import pallas as pl
from jax.experimental.pallas import tpu as pltpu

# ----------------------------------------------------------------------------
# Constants replicated from the PyTorch module (deterministic, computed in numpy)
# ----------------------------------------------------------------------------
_SQ2 = 2.0 ** (-0.5)
DIRECTIONS = np.array(
    [[_SQ2, _SQ2], [0.0, 1.0], [-_SQ2, _SQ2], [1.0, 0.0], [0.0, 0.0],
     [-1.0, 0.0], [_SQ2, -_SQ2], [0.0, -1.0], [-_SQ2, -_SQ2]],
    dtype=np.float32)                      # (9, 2)


def _make_kernel(x_mul=1.0, y_mul=1.0, pw=1.0, swap=False):
    g = np.array([-1.0, 0.0, 1.0], dtype=np.float64)
    gx, gy = np.meshgrid(g, g, indexing="ij")          # torch.meshgrid default = 'ij'
    d = np.sqrt(gx ** 2 + gy ** 2)
    inv = np.where(np.isclose(d, 0.0), 0.0, 1.0 / np.where(d == 0.0, 1.0, d))
    gx = gx * inv
    gy = gy * inv
    gx = x_mul * gx / (np.abs(gx).sum() ** pw)
    gy = y_mul * gy / (np.abs(gy).sum() ** pw)
    k = np.stack([gx, gy], axis=0) if swap else np.stack([gy, gx], axis=0)
    return k.reshape(2, 1, 3, 3).astype(np.float32)


KERNEL = _make_kernel()                    # (2, 1, 3, 3)
K_FLAT = KERNEL.reshape(2, 9)              # K_FLAT[c, n] == kernel[c, 0, n//3, n%3]

# Separable structure of the facing kernel:
#   channel 0: columns kj=0 / kj=2 with h-weights  [W_DIAG, W_MID, W_DIAG], gated by sign(vel_x)
#   channel 1: rows    ki=0 / ki=2 with w-weights  [W_DIAG, W_MID, W_DIAG], gated by sign(vel_y)
W_MID = float(-K_FLAT[0, 3])               # = 1 / (2 + 2*sqrt(2))
W_DIAG = float(-K_FLAT[0, 0])              # = (1/sqrt(2)) / (2 + 2*sqrt(2))

_expect0 = np.array([-W_DIAG, 0, W_DIAG, -W_MID, 0, W_MID, -W_DIAG, 0, W_DIAG], np.float32)
_expect1 = np.array([-W_DIAG, -W_MID, -W_DIAG, 0, 0, 0, W_DIAG, W_MID, W_DIAG], np.float32)
assert np.allclose(K_FLAT[0], _expect0, atol=1e-6)
assert np.allclose(K_FLAT[1], _expect1, atol=1e-6)
# Direction sign groups used by the hoisted masks.
assert np.all(DIRECTIONS[[0, 3, 6], 0] > 0) and np.all(DIRECTIONS[[2, 5, 8], 0] < 0)
assert np.all(DIRECTIONS[[1, 4, 7], 0] == 0)
assert np.all(DIRECTIONS[[0, 1, 2], 1] > 0) and np.all(DIRECTIONS[[6, 7, 8], 1] < 0)
assert np.all(DIRECTIONS[[3, 4, 5], 1] == 0)

V_MAX = 5.0
ATTRACTION = 1.0
REPULSION = 5.0
FRICTION = 0.1
RANDOM = 1.0
NOISE_SCALE = 3.0        # sum of 9 iid N(0,1) == 3 * N(0,1)

# TODO(synk): self.decay_kernel is built in Rule.__init__ but never used in forward(); omitted.


# ----------------------------------------------------------------------------
# Pallas kernel
# ----------------------------------------------------------------------------
def _circshift(x, oh, ow):
    """out[h, w] = x[(h + oh) % H, (w + ow) % W]  (circular 'unfold' shift)."""
    H, W = x.shape[-2], x.shape[-1]
    sh = (-oh) % H
    sw = (-ow) % W
    if sh:
        x = pltpu.roll(x, sh, 0)
    if sw:
        x = pltpu.roll(x, sw, 1)
    return x


def _physarum_kernel(params_ref, mass_ref, trail_ref, mom_ref, noise_ref,
                     mass_out_ref, trail_out_ref, mom_out_ref, force_out_ref):
    A = params_ref[0]
    dt = params_ref[1]
    temp = params_ref[2]

    mass = mass_ref[...]                   # (H, W)
    trail = trail_ref[...]                 # (H, W)
    mom0 = mom_ref[0]                      # (H, W)
    mom1 = mom_ref[1]                      # (H, W)

    zero = jnp.zeros_like(mass)
    small = mass < 1e-8
    inv_mass = jnp.where(small, zero, 1.0 / mass)       # reused for both velocity passes

    # ---- trail: trail += mass; separable circular 3x3 avg pool; scale by (1-A) ----
    tr = trail + mass
    rows = tr + _circshift(tr, -1, 0) + _circshift(tr, 1, 0)
    box = rows + _circshift(rows, 0, -1) + _circshift(rows, 0, 1)
    trail_new = (1.0 - A) * (box * (1.0 / 9.0))
    trail_out_ref[...] = trail_new

    # ---- velocity (pre-update) -----------------------------------------------
    vel0 = mom0 * inv_mass
    vel1 = mom1 * inv_mass

    # ---- new force: attraction/repulsion along facing directions --------------
    # sum_n (attr*trail_unf[n] - rep*mass_unf[n]) * (-K[c,n]) * (vel_c*dir[n,c] > 0)
    # collapses (K is separable, sign(K[c,n]) == -sign(dir[n,c])) to two masked,
    # weighted column/row sums of a single precomputed field.
    field = ATTRACTION * trail_new - REPULSION * mass
    f_hm = _circshift(field, -1, 0)
    f_hp = _circshift(field, 1, 0)
    f_wm = _circshift(field, 0, -1)
    f_wp = _circshift(field, 0, 1)
    col_mix = W_DIAG * (f_hm + f_hp) + W_MID * field
    row_mix = W_DIAG * (f_wm + f_wp) + W_MID * field

    s_plus0 = _circshift(col_mix, 0, -1)     # active when vel_x > 0
    s_minus0 = -_circshift(col_mix, 0, 1)    # active when vel_x < 0
    s_plus1 = _circshift(row_mix, -1, 0)     # active when vel_y > 0
    s_minus1 = -_circshift(row_mix, 1, 0)    # active when vel_y < 0

    nf0 = (jnp.where(vel0 > 0.0, s_plus0, jnp.where(vel0 < 0.0, s_minus0, zero))
           - (9.0 * FRICTION) * vel0
           + (RANDOM * NOISE_SCALE) * noise_ref[0])
    nf1 = (jnp.where(vel1 > 0.0, s_plus1, jnp.where(vel1 < 0.0, s_minus1, zero))
           - (9.0 * FRICTION) * vel1
           + (RANDOM * NOISE_SCALE) * noise_ref[1])
    force_out_ref[0] = nf0
    force_out_ref[1] = nf1

    # ---- momentum update + speed clamp ----------------------------------------
    m0 = jnp.where(small, zero, mom0 + nf0 * dt)
    m1 = jnp.where(small, zero, mom1 + nf1 * dt)
    sumsq = m0 * m0 + m1 * m1
    nrm = jnp.sqrt(sumsq)
    scale = jnp.where(nrm > V_MAX * mass, V_MAX * lax.rsqrt(sumsq), 1.0)
    m0 = m0 * scale
    m1 = m1 * scale

    v0 = m0 * inv_mass
    v1 = m1 * inv_mass

    # ---- propagation: softmax over the 9 directions ----------------------------
    av0 = _SQ2 * v0
    av1 = _SQ2 * v1
    diag_pp = av0 + av1
    diag_pm = av0 - av1
    ps = [diag_pp, v1, -diag_pm, v0, zero, -v0, diag_pm, -v1, -diag_pp]
    logits = [jnp.where(p > 0.0, p, 1e-10) * temp for p in ps]

    mx = logits[0]
    for d in range(1, 9):
        mx = jnp.maximum(mx, logits[d])
    exps = [jnp.exp(l - mx) for l in logits]
    den = exps[0]
    for d in range(1, 9):
        den = den + exps[d]
    inv_den = 1.0 / den                     # exact divide, once per pixel (not per direction)

    # fold the softmax normalization into the three carrier planes
    q_m = mass * inv_den
    q0 = m0 * inv_den
    q1 = m1 * inv_den

    # ---- mass / momentum propagation: circular conv with the 'moves' kernels --
    # moves[d] shifts by (1 - d//3, 1 - d%3); group the 9 offsets by h-shift so the
    # sublane roll is applied once to each partial sum.
    def conv_moves(x):
        acc = None
        for base, oh in ((0, 1), (3, 0), (6, -1)):
            part = (_circshift(x * exps[base], 0, 1)
                    + x * exps[base + 1]
                    + _circshift(x * exps[base + 2], 0, -1))
            if oh != 0:
                part = _circshift(part, oh, 0)
            acc = part if acc is None else acc + part
        return acc

    mass_conv = conv_moves(q_m)
    mom_out_ref[0] = conv_moves(q0)
    mom_out_ref[1] = conv_moves(q1)

    mass_tot = jnp.sum(mass, keepdims=True)                       # (1, 1)
    ratio = mass_tot / (jnp.sum(mass_conv, keepdims=True) + 1e-10)
    mass_out_ref[...] = ratio * mass_conv


# ----------------------------------------------------------------------------
# Wrapper (glue: NCHW <-> kernel layout, deterministic noise)
# ----------------------------------------------------------------------------
def physarum_forward(mass, trail, momentum, force, A, dt=0.01, temp=1.0, *, noise_key):
    # `force` input is overwritten inside the PyTorch forward; it does not affect outputs.
    del force
    _, _, H, W = mass.shape
    mass2 = mass.reshape(H, W).astype(jnp.float32)
    trail2 = trail.reshape(H, W).astype(jnp.float32)
    mom2 = momentum.reshape(2, H, W).astype(jnp.float32)
    # torch.randn_like(new_force) draws 9 iid normals per (channel, pixel) that are only
    # summed; one N(0,1) plane scaled by 3 in-kernel is distributionally identical
    # (cuts the noise DMA from 18 planes to 2).
    noise = jax.random.normal(noise_key, (2, H, W), dtype=jnp.float32)
    params = jnp.array([A, dt, temp], dtype=jnp.float32)

    vmem = pl.BlockSpec(memory_space=pltpu.MemorySpace.VMEM)
    smem = pl.BlockSpec(memory_space=pltpu.MemorySpace.SMEM)

    # 12 I/O planes + compiler temporaries (exps, shifted fields, ...): size the scoped
    # VMEM limit explicitly instead of relying on the 16/32 MiB defaults.
    bytes_per_plane = H * W * 4
    vmem_bytes = int(min(64 * 1024 * 1024, max(16 * 1024 * 1024, 48 * bytes_per_plane)))

    # TODO(synk): for very large H*W, tile over H with a +-3-row circular halo (two-pass
    # mass renormalization, mass_tot passed as an SMEM scalar) and mark that grid axis
    # "parallel" for v7x's two TensorCores; the monolithic block is fine for moderate grids.
    mass_o, trail_o, mom_o, force_o = pl.pallas_call(
        _physarum_kernel,
        out_shape=(
            jax.ShapeDtypeStruct((H, W), jnp.float32),
            jax.ShapeDtypeStruct((H, W), jnp.float32),
            jax.ShapeDtypeStruct((2, H, W), jnp.float32),
            jax.ShapeDtypeStruct((2, H, W), jnp.float32),
        ),
        in_specs=[smem, vmem, vmem, vmem, vmem],
        out_specs=(vmem, vmem, vmem, vmem),
        compiler_params=pltpu.CompilerParams(vmem_limit_bytes=vmem_bytes),
    )(params, mass2, trail2, mom2, noise)

    return (mass_o.reshape(1, 1, H, W),
            trail_o.reshape(1, 1, H, W),
            mom_o.reshape(2, 1, H, W),
            force_o.reshape(2, 1, H, W))


if __name__ == "__main__":
    key = jax.random.PRNGKey(0)
    k1, k2, k3, k4 = jax.random.split(key, 4)
    H, W = 16, 128  # lane-friendly width (last dim multiple of 128)

    mass = jax.random.uniform(k1, (1, 1, H, W), dtype=jnp.float32) + 0.1
    trail = jax.random.uniform(k2, (1, 1, H, W), dtype=jnp.float32)
    momentum = 0.1 * jax.random.normal(k3, (2, 1, H, W), dtype=jnp.float32)
    force = jnp.zeros((2, 1, H, W), jnp.float32)

    outs = physarum_forward(mass, trail, momentum, force, A=0.5, dt=0.01, temp=1.0, noise_key=k4)
    jax.block_until_ready(outs)

    m_out, t_out, p_out, f_out = outs
    assert m_out.shape == (1, 1, H, W)
    assert t_out.shape == (1, 1, H, W)
    assert p_out.shape == (2, 1, H, W)
    assert f_out.shape == (2, 1, H, W)
    assert bool(jnp.all(jnp.isfinite(m_out)))
    print("KERNEL_OK")
</pallas_src>

<mosaic_0001>
module attributes {stable_mosaic.version = 11 : i64} {
  func.func @_physarum_kernel(%arg0: memref<3xf32, #tpu.memory_space<smem>>, %arg1: memref<16x128xf32, #tpu.memory_space<vmem>>, %arg2: memref<16x128xf32, #tpu.memory_space<vmem>>, %arg3: memref<2x16x128xf32, #tpu.memory_space<vmem>>, %arg4: memref<2x16x128xf32, #tpu.memory_space<vmem>>, %arg5: memref<16x128xf32, #tpu.memory_space<vmem>>, %arg6: memref<16x128xf32, #tpu.memory_space<vmem>>, %arg7: memref<2x16x128xf32, #tpu.memory_space<vmem>>, %arg8: memref<2x16x128xf32, #tpu.memory_space<vmem>>) attributes {dimension_semantics = [], scalar_prefetch = 0 : i64, scratch_operands = 0 : i64, tpu.core_type = #tpu.core_type<tc>} {
    %c0 = arith.constant 0 : index
    %0 = memref.load %arg0[%c0] : memref<3xf32, #tpu.memory_space<smem>>
    %c1 = arith.constant 1 : index
    %1 = memref.load %arg0[%c1] : memref<3xf32, #tpu.memory_space<smem>>
    %c2 = arith.constant 2 : index
    %2 = memref.load %arg0[%c2] : memref<3xf32, #tpu.memory_space<smem>>
    %c0_0 = arith.constant 0 : index
    %c0_1 = arith.constant 0 : index
    %3 = vector.load %arg1[%c0_0, %c0_1] : memref<16x128xf32, #tpu.memory_space<vmem>>, vector<16x128xf32>
    %c0_2 = arith.constant 0 : index
    %c0_3 = arith.constant 0 : index
    %4 = vector.load %arg2[%c0_2, %c0_3] : memref<16x128xf32, #tpu.memory_space<vmem>>, vector<16x128xf32>
    %c0_4 = arith.constant 0 : index
    %c0_5 = arith.constant 0 : index
    %c0_6 = arith.constant 0 : index
    %5 = vector.load %arg3[%c0_4, %c0_5, %c0_6] : memref<2x16x128xf32, #tpu.memory_space<vmem>>, vector<1x16x128xf32>
    %6 = vector.shape_cast %5 : vector<1x16x128xf32> to vector<16x128xf32>
    %c1_7 = arith.constant 1 : index
    %c0_8 = arith.constant 0 : index
    %c0_9 = arith.constant 0 : index
    %7 = vector.load %arg3[%c1_7, %c0_8, %c0_9] : memref<2x16x128xf32, #tpu.memory_space<vmem>>, vector<1x16x128xf32>
    %8 = vector.shape_cast %7 : vector<1x16x128xf32> to vector<16x128xf32>
    %cst = arith.constant 0.000000e+00 : f32
    %9 = vector.broadcast %cst : f32 to vector<16x128xf32>
    %cst_10 = arith.constant 9.99999993E-9 : f32
    %10 = vector.broadcast %cst_10 : f32 to vector<16x128xf32>
    %11 = arith.cmpf olt, %3, %10 : vector<16x128xf32>
    %cst_11 = arith.constant 1.000000e+00 : f32
    %12 = vector.broadcast %cst_11 : f32 to vector<16x128xf32>
    %13 = arith.divf %12, %3 : vector<16x128xf32>
    %14 = arith.select %11, %9, %13 : vector<16x128xi1>, vector<16x128xf32>
    %15 = arith.addf %4, %3 : vector<16x128xf32>
    %c1_i32 = arith.constant 1 : i32
    %16 = tpu.dynamic_rotate %15 by %c1_i32 dim 0 : vector<16x128xf32>, i32 -> vector<16x128xf32>
    %17 = arith.addf %15, %16 : vector<16x128xf32>
    %c15_i32 = arith.constant 15 : i32
    %18 = tpu.dynamic_rotate %15 by %c15_i32 dim 0 : vector<16x128xf32>, i32 -> vector<16x128xf32>
    %19 = arith.addf %17, %18 : vector<16x128xf32>
    %c1_i32_12 = arith.constant 1 : i32
    %20 = tpu.dynamic_rotate %19 by %c1_i32_12 dim 1 : vector<16x128xf32>, i32 -> vector<16x128xf32>
    %21 = arith.addf %19, %20 : vector<16x128xf32>
    %c127_i32 = arith.constant 127 : i32
    %22 = tpu.dynamic_rotate %19 by %c127_i32 dim 1 : vector<16x128xf32>, i32 -> vector<16x128xf32>
    %23 = arith.addf %21, %22 : vector<16x128xf32>
    %cst_13 = arith.constant 1.000000e+00 : f32
    %24 = arith.subf %cst_13, %0 : f32
    %cst_14 = arith.constant 0.111111112 : f32
    %25 = vector.broadcast %cst_14 : f32 to vector<16x128xf32>
    %26 = arith.mulf %23, %25 : vector<16x128xf32>
    %27 = vector.broadcast %24 : f32 to vector<16x128xf32>
    %28 = arith.mulf %27, %26 : vector<16x128xf32>
    %c0_15 = arith.constant 0 : index
    %c0_16 = arith.constant 0 : index
    %29 = vector.load %arg6[%c0_15, %c0_16] : memref<16x128xf32, #tpu.memory_space<vmem>>, vector<16x128xf32>
    tpu.vector_store %arg6[%c0_15, %c0_16], %28 {strides = array<i32>} : memref<16x128xf32, #tpu.memory_space<vmem>>, vector<16x128xf32>,
    %30 = arith.mulf %6, %14 : vector<16x128xf32>
    %31 = arith.mulf %8, %14 : vector<16x128xf32>
    %cst_17 = arith.constant 1.000000e+00 : f32
    %32 = vector.broadcast %cst_17 : f32 to vector<16x128xf32>
    %33 = arith.mulf %32, %28 : vector<16x128xf32>
    %cst_18 = arith.constant 5.000000e+00 : f32
    %34 = vector.broadcast %cst_18 : f32 to vector<16x128xf32>
    %35 = arith.mulf %34, %3 : vector<16x128xf32>
    %36 = arith.subf %33, %35 : vector<16x128xf32>
    %c1_i32_19 = arith.constant 1 : i32
    %37 = tpu.dynamic_rotate %36 by %c1_i32_19 dim 0 : vector<16x128xf32>, i32 -> vector<16x128xf32>
    %c15_i32_20 = arith.constant 15 : i32
    %38 = tpu.dynamic_rotate %36 by %c15_i32_20 dim 0 : vector<16x128xf32>, i32 -> vector<16x128xf32>
    %c1_i32_21 = arith.constant 1 : i32
    %39 = tpu.dynamic_rotate %36 by %c1_i32_21 dim 1 : vector<16x128xf32>, i32 -> vector<16x128xf32>
    %c127_i32_22 = arith.constant 127 : i32
    %40 = tpu.dynamic_rotate %36 by %c127_i32_22 dim 1 : vector<16x128xf32>, i32 -> vector<16x128xf32>
    %41 = arith.addf %37, %38 : vector<16x128xf32>
    %cst_23 = arith.constant 0.146446615 : f32
    %42 = vector.broadcast %cst_23 : f32 to vector<16x128xf32>
    %43 = arith.mulf %42, %41 : vector<16x128xf32>
    %cst_24 = arith.constant 0.207106784 : f32
    %44 = vector.broadcast %cst_24 : f32 to vector<16x128xf32>
    %45 = arith.mulf %44, %36 : vector<16x128xf32>
    %46 = arith.addf %43, %45 : vector<16x128xf32>
    %47 = arith.addf %39, %40 : vector<16x128xf32>
    %cst_25 = arith.constant 0.146446615 : f32
    %48 = vector.broadcast %cst_25 : f32 to vector<16x128xf32>
    %49 = arith.mulf %48, %47 : vector<16x128xf32>
    %cst_26 = arith.constant 0.207106784 : f32
    %50 = vector.broadcast %cst_26 : f32 to vector<16x128xf32>
    %51 = arith.mulf %50, %36 : vector<16x128xf32>
    %52 = arith.addf %49, %51 : vector<16x128xf32>
    %c1_i32_27 = arith.constant 1 : i32
    %53 = tpu.dynamic_rotate %46 by %c1_i32_27 dim 1 : vector<16x128xf32>, i32 -> vector<16x128xf32>
    %c127_i32_28 = arith.constant 127 : i32
    %54 = tpu.dynamic_rotate %46 by %c127_i32_28 dim 1 : vector<16x128xf32>, i32 -> vector<16x128xf32>
    %cst_29 = arith.constant 0.000000e+00 : f32
    %55 = vector.broadcast %cst_29 : f32 to vector<16x128xf32>
    %56 = arith.subf %55, %54 : vector<16x128xf32>
    %c1_i32_30 = arith.constant 1 : i32
    %57 = tpu.dynamic_rotate %52 by %c1_i32_30 dim 0 : vector<16x128xf32>, i32 -> vector<16x128xf32>
    %c15_i32_31 = arith.constant 15 : i32
    %58 = tpu.dynamic_rotate %52 by %c15_i32_31 dim 0 : vector<16x128xf32>, i32 -> vector<16x128xf32>
    %cst_32 = arith.constant 0.000000e+00 : f32
    %59 = vector.broadcast %cst_32 : f32 to vector<16x128xf32>
    %60 = arith.subf %59, %58 : vector<16x128xf32>
    %cst_33 = arith.constant 0.000000e+00 : f32
    %61 = vector.broadcast %cst_33 : f32 to vector<16x128xf32>
    %62 = arith.cmpf ogt, %30, %61 : vector<16x128xf32>
    %cst_34 = arith.constant 0.000000e+00 : f32
    %63 = vector.broadcast %cst_34 : f32 to vector<16x128xf32>
    %64 = arith.cmpf olt, %30, %63 : vector<16x128xf32>
    %65 = arith.select %64, %56, %9 : vector<16x128xi1>, vector<16x128xf32>
    %66 = arith.select %62, %53, %65 : vector<16x128xi1>, vector<16x128xf32>
    %cst_35 = arith.constant 0.899999976 : f32
    %67 = vector.broadcast %cst_35 : f32 to vector<16x128xf32>
    %68 = arith.mulf %67, %30 : vector<16x128xf32>
    %69 = arith.subf %66, %68 : vector<16x128xf32>
    %c0_36 = arith.constant 0 : index
    %c0_37 = arith.constant 0 : index
    %c0_38 = arith.constant 0 : index
    %70 = vector.load %arg4[%c0_36, %c0_37, %c0_38] : memref<2x16x128xf32, #tpu.memory_space<vmem>>, vector<1x16x128xf32>
    %71 = vector.shape_cast %70 : vector<1x16x128xf32> to vector<16x128xf32>
    %cst_39 = arith.constant 3.000000e+00 : f32
    %72 = vector.broadcast %cst_39 : f32 to vector<16x128xf32>
    %73 = arith.mulf %72, %71 : vector<16x128xf32>
    %74 = arith.addf %69, %73 : vector<16x128xf32>
    %cst_40 = arith.constant 0.000000e+00 : f32
    %75 = vector.broadcast %cst_40 : f32 to vector<16x128xf32>
    %76 = arith.cmpf ogt, %31, %75 : vector<16x128xf32>
    %cst_41 = arith.constant 0.000000e+00 : f32
    %77 = vector.broadcast %cst_41 : f32 to vector<16x128xf32>
    %78 = arith.cmpf olt, %31, %77 : vector<16x128xf32>
    %79 = arith.select %78, %60, %9 : vector<16x128xi1>, vector<16x128xf32>
    %80 = arith.select %76, %57, %79 : vector<16x128xi1>, vector<16x128xf32>
    %cst_42 = arith.constant 0.899999976 : f32
    %81 = vector.broadcast %cst_42 : f32 to vector<16x128xf32>
    %82 = arith.mulf %81, %31 : vector<16x128xf32>
    %83 = arith.subf %80, %82 : vector<16x128xf32>
    %c1_43 = arith.constant 1 : index
    %c0_44 = arith.constant 0 : index
    %c0_45 = arith.constant 0 : index
    %84 = vector.load %arg4[%c1_43, %c0_44, %c0_45] : memref<2x16x128xf32, #tpu.memory_space<vmem>>, vector<1x16x128xf32>
    %85 = vector.shape_cast %84 : vector<1x16x128xf32> to vector<16x128xf32>
    %cst_46 = arith.constant 3.000000e+00 : f32
    %86 = vector.broadcast %cst_46 : f32 to vector<16x128xf32>
    %87 = arith.mulf %86, %85 : vector<16x128xf32>
    %88 = arith.addf %83, %87 : vector<16x128xf32>
    %c0_47 = arith.constant 0 : index
    %c0_48 = arith.constant 0 : index
    %c0_49 = arith.constant 0 : index
    %89 = vector.load %arg8[%c0_47, %c0_48, %c0_49] : memref<2x16x128xf32, #tpu.memory_space<vmem>>, vector<1x16x128xf32>
    %90 = vector.shape_cast %89 : vector<1x16x128xf32> to vector<16x128xf32>
    %91 = vector.shape_cast %74 : vector<16x128xf32> to vector<1x16x128xf32>
    tpu.vector_store %arg8[%c0_47, %c0_48, %c0_49], %91 {strides = array<i32>} : memref<2x16x128xf32, #tpu.memory_space<vmem>>, vector<1x16x128xf32>,
    %c1_50 = arith.constant 1 : index
    %c0_51 = arith.constant 0 : index
    %c0_52 = arith.constant 0 : index
    %92 = vector.load %arg8[%c1_50, %c0_51, %c0_52] : memref<2x16x128xf32, #tpu.memory_space<vmem>>, vector<1x16x128xf32>
    %93 = vector.shape_cast %92 : vector<1x16x128xf32> to vector<16x128xf32>
    %94 = vector.shape_cast %88 : vector<16x128xf32> to vector<1x16x128xf32>
    tpu.vector_store %arg8[%c1_50, %c0_51, %c0_52], %94 {strides = array<i32>} : memref<2x16x128xf32, #tpu.memory_space<vmem>>, vector<1x16x128xf32>,
    %95 = vector.broadcast %1 : f32 to vector<16x128xf32>
    %96 = arith.mulf %74, %95 : vector<16x128xf32>
    %97 = arith.addf %6, %96 : vector<16x128xf32>
    %98 = arith.select %11, %9, %97 : vector<16x128xi1>, vector<16x128xf32>
    %99 = vector.broadcast %1 : f32 to vector<16x128xf32>
    %100 = arith.mulf %88, %99 : vector<16x128xf32>
    %101 = arith.addf %8, %100 : vector<16x128xf32>
    %102 = arith.select %11, %9, %101 : vector<16x128xi1>, vector<16x128xf32>
    %103 = arith.mulf %98, %98 : vector<16x128xf32>
    %104 = arith.mulf %102, %102 : vector<16x128xf32>
    %105 = arith.addf %103, %104 : vector<16x128xf32>
    %106 = math.sqrt %105 : vector<16x128xf32>
    %cst_53 = arith.constant 5.000000e+00 : f32
    %107 = vector.broadcast %cst_53 : f32 to vector<16x128xf32>
    %108 = arith.mulf %107, %3 : vector<16x128xf32>
    %109 = arith.cmpf ogt, %106, %108 : vector<16x128xf32>
    %110 = math.rsqrt %105 : vector<16x128xf32>
    %cst_54 = arith.constant 5.000000e+00 : f32
    %111 = vector.broadcast %cst_54 : f32 to vector<16x128xf32>
    %112 = arith.mulf %111, %110 : vector<16x128xf32>
    %cst_55 = arith.constant 1.000000e+00 : f32
    %113 = vector.broadcast %cst_55 : f32 to vector<16x128xf32>
    %114 = arith.select %109, %112, %113 : vector<16x128xi1>, vector<16x128xf32>
    %115 = arith.mulf %98, %114 : vector<16x128xf32>
    %116 = arith.mulf %102, %114 : vector<16x128xf32>
    %117 = arith.mulf %115, %14 : vector<16x128xf32>
    %118 = arith.mulf %116, %14 : vector<16x128xf32>
    %cst_56 = arith.constant 0.707106769 : f32
    %119 = vector.broadcast %cst_56 : f32 to vector<16x128xf32>
    %120 = arith.mulf %119, %117 : vector<16x128xf32>
    %cst_57 = arith.constant 0.707106769 : f32
    %121 = vector.broadcast %cst_57 : f32 to vector<16x128xf32>
    %122 = arith.mulf %121, %118 : vector<16x128xf32>
    %123 = arith.addf %120, %122 : vector<16x128xf32>
    %124 = arith.subf %120, %122 : vector<16x128xf32>
    %cst_58 = arith.constant 0.000000e+00 : f32
    %125 = vector.broadcast %cst_58 : f32 to vector<16x128xf32>
    %126 = arith.subf %125, %124 : vector<16x128xf32>
    %cst_59 = arith.constant 0.000000e+00 : f32
    %127 = vector.broadcast %cst_59 : f32 to vector<16x128xf32>
    %128 = arith.subf %127, %117 : vector<16x128xf32>
    %cst_60 = arith.constant 0.000000e+00 : f32
    %129 = vector.broadcast %cst_60 : f32 to vector<16x128xf32>
    %130 = arith.subf %129, %118 : vector<16x128xf32>
    %cst_61 = arith.constant 0.000000e+00 : f32
    %131 = vector.broadcast %cst_61 : f32 to vector<16x128xf32>
    %132 = arith.subf %131, %123 : vector<16x128xf32>
    %cst_62 = arith.constant 0.000000e+00 : f32
    %133 = vector.broadcast %cst_62 : f32 to vector<16x128xf32>
    %134 = arith.cmpf ogt, %123, %133 : vector<16x128xf32>
    %cst_63 = arith.constant 1.000000e-10 : f32
    %135 = vector.broadcast %cst_63 : f32 to vector<16x128xf32>
    %136 = arith.select %134, %123, %135 : vector<16x128xi1>, vector<16x128xf32>
    %137 = vector.broadcast %2 : f32 to vector<16x128xf32>
    %138 = arith.mulf %136, %137 : vector<16x128xf32>
    %cst_64 = arith.constant 0.000000e+00 : f32
    %139 = vector.broadcast %cst_64 : f32 to vector<16x128xf32>
    %140 = arith.cmpf ogt, %118, %139 : vector<16x128xf32>
    %cst_65 = arith.constant 1.000000e-10 : f32
    %141 = vector.broadcast %cst_65 : f32 to vector<16x128xf32>
    %142 = arith.select %140, %118, %141 : vector<16x128xi1>, vector<16x128xf32>
    %143 = vector.broadcast %2 : f32 to vector<16x128xf32>
    %144 = arith.mulf %142, %143 : vector<16x128xf32>
    %cst_66 = arith.constant 0.000000e+00 : f32
    %145 = vector.broadcast %cst_66 : f32 to vector<16x128xf32>
    %146 = arith.cmpf ogt, %126, %145 : vector<16x128xf32>
    %cst_67 = arith.constant 1.000000e-10 : f32
    %147 = vector.broadcast %cst_67 : f32 to vector<16x128xf32>
    %148 = arith.select %146, %126, %147 : vector<16x128xi1>, vector<16x128xf32>
    %149 = vector.broadcast %2 : f32 to vector<16x128xf32>
    %150 = arith.mulf %148, %149 : vector<16x128xf32>
    %cst_68 = arith.constant 0.000000e+00 : f32
    %151 = vector.broadcast %cst_68 : f32 to vector<16x128xf32>
    %152 = arith.cmpf ogt, %117, %151 : vector<16x128xf32>
    %cst_69 = arith.constant 1.000000e-10 : f32
    %153 = vector.broadcast %cst_69 : f32 to vector<16x128xf32>
    %154 = arith.select %152, %117, %153 : vector<16x128xi1>, vector<16x128xf32>
    %155 = vector.broadcast %2 : f32 to vector<16x128xf32>
    %156 = arith.mulf %154, %155 : vector<16x128xf32>
    %cst_70 = arith.constant 0.000000e+00 : f32
    %157 = vector.broadcast %cst_70 : f32 to vector<16x128xf32>
    %158 = arith.cmpf ogt, %9, %157 : vector<16x128xf32>
    %cst_71 = arith.constant 1.000000e-10 : f32
    %159 = vector.broadcast %cst_71 : f32 to vector<16x128xf32>
    %160 = arith.select %158, %9, %159 : vector<16x128xi1>, vector<16x128xf32>
    %161 = vector.broadcast %2 : f32 to vector<16x128xf32>
    %162 = arith.mulf %160, %161 : vector<16x128xf32>
    %cst_72 = arith.constant 0.000000e+00 : f32
    %163 = vector.broadcast %cst_72 : f32 to vector<16x128xf32>
    %164 = arith.cmpf ogt, %128, %163 : vector<16x128xf32>
    %cst_73 = arith.constant 1.000000e-10 : f32
    %165 = vector.broadcast %cst_73 : f32 to vector<16x128xf32>
    %166 = arith.select %164, %128, %165 : vector<16x128xi1>, vector<16x128xf32>
    %167 = vector.broadcast %2 : f32 to vector<16x128xf32>
    %168 = arith.mulf %166, %167 : vector<16x128xf32>
    %cst_74 = arith.constant 0.000000e+00 : f32
    %169 = vector.broadcast %cst_74 : f32 to vector<16x128xf32>
    %170 = arith.cmpf ogt, %124, %169 : vector<16x128xf32>
    %cst_75 = arith.constant 1.000000e-10 : f32
    %171 = vector.broadcast %cst_75 : f32 to vector<16x128xf32>
    %172 = arith.select %170, %124, %171 : vector<16x128xi1>, vector<16x128xf32>
    %173 = vector.broadcast %2 : f32 to vector<16x128xf32>
    %174 = arith.mulf %172, %173 : vector<16x128xf32>
    %cst_76 = arith.constant 0.000000e+00 : f32
    %175 = vector.broadcast %cst_76 : f32 to vector<16x128xf32>
    %176 = arith.cmpf ogt, %130, %175 : vector<16x128xf32>
    %cst_77 = arith.constant 1.000000e-10 : f32
    %177 = vector.broadcast %cst_77 : f32 to vector<16x128xf32>
    %178 = arith.select %176, %130, %177 : vector<16x128xi1>, vector<16x128xf32>
    %179 = vector.broadcast %2 : f32 to vector<16x128xf32>
    %180 = arith.mulf %178, %179 : vector<16x128xf32>
    %cst_78 = arith.constant 0.000000e+00 : f32
    %181 = vector.broadcast %cst_78 : f32 to vector<16x128xf32>
    %182 = arith.cmpf ogt, %132, %181 : vector<16x128xf32>
    %cst_79 = arith.constant 1.000000e-10 : f32
    %183 = vector.broadcast %cst_79 : f32 to vector<16x128xf32>
    %184 = arith.select %182, %132, %183 : vector<16x128xi1>, vector<16x128xf32>
    %185 = vector.broadcast %2 : f32 to vector<16x128xf32>
    %186 = arith.mulf %184, %185 : vector<16x128xf32>
    %187 = arith.maximumf %138, %144 : vector<16x128xf32>
    %188 = arith.maximumf %187, %150 : vector<16x128xf32>
    %189 = arith.maximumf %188, %156 : vector<16x128xf32>
    %190 = arith.maximumf %189, %162 : vector<16x128xf32>
    %191 = arith.maximumf %190, %168 : vector<16x128xf32>
    %192 = arith.maximumf %191, %174 : vector<16x128xf32>
    %193 = arith.maximumf %192, %180 : vector<16x128xf32>
    %194 = arith.maximumf %193, %186 : vector<16x128xf32>
    %195 = arith.subf %138, %194 : vector<16x128xf32>
    %196 = math.exp %195 : vector<16x128xf32>
    %197 = arith.subf %144, %194 : vector<16x128xf32>
    %198 = math.exp %197 : vector<16x128xf32>
    %199 = arith.subf %150, %194 : vector<16x128xf32>
    %200 = math.exp %199 : vector<16x128xf32>
    %201 = arith.subf %156, %194 : vector<16x128xf32>
    %202 = math.exp %201 : vector<16x128xf32>
    %203 = arith.subf %162, %194 : vector<16x128xf32>
    %204 = math.exp %203 : vector<16x128xf32>
    %205 = arith.subf %168, %194 : vector<16x128xf32>
    %206 = math.exp %205 : vector<16x128xf32>
    %207 = arith.subf %174, %194 : vector<16x128xf32>
    %208 = math.exp %207 : vector<16x128xf32>
    %209 = arith.subf %180, %194 : vector<16x128xf32>
    %210 = math.exp %209 : vector<16x128xf32>
    %211 = arith.subf %186, %194 : vector<16x128xf32>
    %212 = math.exp %211 : vector<16x128xf32>
    %213 = arith.addf %196, %198 : vector<16x128xf32>
    %214 = arith.addf %213, %200 : vector<16x128xf32>
    %215 = arith.addf %214, %202 : vector<16x128xf32>
    %216 = arith.addf %215, %204 : vector<16x128xf32>
    %217 = arith.addf %216, %206 : vector<16x128xf32>
    %218 = arith.addf %217, %208 : vector<16x128xf32>
    %219 = arith.addf %218, %210 : vector<16x128xf32>
    %220 = arith.addf %219, %212 : vector<16x128xf32>
    %cst_80 = arith.constant 1.000000e+00 : f32
    %221 = vector.broadcast %cst_80 : f32 to vector<16x128xf32>
    %222 = arith.divf %221, %220 : vector<16x128xf32>
    %223 = arith.mulf %3, %222 : vector<16x128xf32>
    %224 = arith.mulf %115, %222 : vector<16x128xf32>
    %225 = arith.mulf %116, %222 : vector<16x128xf32>
    %226 = arith.mulf %223, %196 : vector<16x128xf32>
    %c127_i32_81 = arith.constant 127 : i32
    %227 = tpu.dynamic_rotate %226 by %c127_i32_81 dim 1 : vector<16x128xf32>, i32 -> vector<16x128xf32>
    %228 = arith.mulf %223, %198 : vector<16x128xf32>
    %229 = arith.addf %227, %228 : vector<16x128xf32>
    %230 = arith.mulf %223, %200 : vector<16x128xf32>
    %c1_i32_82 = arith.constant 1 : i32
    %231 = tpu.dynamic_rotate %230 by %c1_i32_82 dim 1 : vector<16x128xf32>, i32 -> vector<16x128xf32>
    %232 = arith.addf %229, %231 : vector<16x128xf32>
    %c15_i32_83 = arith.constant 15 : i32
    %233 = tpu.dynamic_rotate %232 by %c15_i32_83 dim 0 : vector<16x128xf32>, i32 -> vector<16x128xf32>
    %234 = arith.mulf %223, %202 : vector<16x128xf32>
    %c127_i32_84 = arith.constant 127 : i32
    %235 = tpu.dynamic_rotate %234 by %c127_i32_84 dim 1 : vector<16x128xf32>, i32 -> vector<16x128xf32>
    %236 = arith.mulf %223, %204 : vector<16x128xf32>
    %237 = arith.addf %235, %236 : vector<16x128xf32>
    %238 = arith.mulf %223, %206 : vector<16x128xf32>
    %c1_i32_85 = arith.constant 1 : i32
    %239 = tpu.dynamic_rotate %238 by %c1_i32_85 dim 1 : vector<16x128xf32>, i32 -> vector<16x128xf32>
    %240 = arith.addf %237, %239 : vector<16x128xf32>
    %241 = arith.addf %233, %240 : vector<16x128xf32>
    %242 = arith.mulf %223, %208 : vector<16x128xf32>
    %c127_i32_86 = arith.constant 127 : i32
    %243 = tpu.dynamic_rotate %242 by %c127_i32_86 dim 1 : vector<16x128xf32>, i32 -> vector<16x128xf32>
    %244 = arith.mulf %223, %210 : vector<16x128xf32>
    %245 = arith.addf %243, %244 : vector<16x128xf32>
    %246 = arith.mulf %223, %212 : vector<16x128xf32>
    %c1_i32_87 = arith.constant 1 : i32
    %247 = tpu.dynamic_rotate %246 by %c1_i32_87 dim 1 : vector<16x128xf32>, i32 -> vector<16x128xf32>
    %248 = arith.addf %245, %247 : vector<16x128xf32>
    %c1_i32_88 = arith.constant 1 : i32
    %249 = tpu.dynamic_rotate %248 by %c1_i32_88 dim 0 : vector<16x128xf32>, i32 -> vector<16x128xf32>
    %250 = arith.addf %241, %249 : vector<16x128xf32>
    %251 = arith.mulf %224, %196 : vector<16x128xf32>
    %c127_i32_89 = arith.constant 127 : i32
    %252 = tpu.dynamic_rotate %251 by %c127_i32_89 dim 1 : vector<16x128xf32>, i32 -> vector<16x128xf32>
    %253 = arith.mulf %224, %198 : vector<16x128xf32>
    %254 = arith.addf %252, %253 : vector<16x128xf32>
    %255 = arith.mulf %224, %200 : vector<16x128xf32>
    %c1_i32_90 = arith.constant 1 : i32
    %256 = tpu.dynamic_rotate %255 by %c1_i32_90 dim 1 : vector<16x128xf32>, i32 -> vector<16x128xf32>
    %257 = arith.addf %254, %256 : vector<16x128xf32>
    %c15_i32_91 = arith.constant 15 : i32
    %258 = tpu.dynamic_rotate %257 by %c15_i32_91 dim 0 : vector<16x128xf32>, i32 -> vector<16x128xf32>
    %259 = arith.mulf %224, %202 : vector<16x128xf32>
    %c127_i32_92 = arith.constant 127 : i32
    %260 = tpu.dynamic_rotate %259 by %c127_i32_92 dim 1 : vector<16x128xf32>, i32 -> vector<16x128xf32>
    %261 = arith.mulf %224, %204 : vector<16x128xf32>
    %262 = arith.addf %260, %261 : vector<16x128xf32>
    %263 = arith.mulf %224, %206 : vector<16x128xf32>
    %c1_i32_93 = arith.constant 1 : i32
    %264 = tpu.dynamic_rotate %263 by %c1_i32_93 dim 1 : vector<16x128xf32>, i32 -> vector<16x128xf32>
    %265 = arith.addf %262, %264 : vector<16x128xf32>
    %266 = arith.addf %258, %265 : vector<16x128xf32>
    %267 = arith.mulf %224, %208 : vector<16x128xf32>
    %c127_i32_94 = arith.constant 127 : i32
    %268 = tpu.dynamic_rotate %267 by %c127_i32_94 dim 1 : vector<16x128xf32>, i32 -> vector<16x128xf32>
    %269 = arith.mulf %224, %210 : vector<16x128xf32>
    %270 = arith.addf %268, %269 : vector<16x128xf32>
    %271 = arith.mulf %224, %212 : vector<16x128xf32>
    %c1_i32_95 = arith.constant 1 : i32
    %272 = tpu.dynamic_rotate %271 by %c1_i32_95 dim 1 : vector<16x128xf32>, i32 -> vector<16x128xf32>
    %273 = arith.addf %270, %272 : vector<16x128xf32>
    %c1_i32_96 = arith.constant 1 : i32
    %274 = tpu.dynamic_rotate %273 by %c1_i32_96 dim 0 : vector<16x128xf32>, i32 -> vector<16x128xf32>
    %275 = arith.addf %266, %274 : vector<16x128xf32>
    %c0_97 = arith.constant 0 : index
    %c0_98 = arith.constant 0 : index
    %c0_99 = arith.constant 0 : index
    %276 = vector.load %arg7[%c0_97, %c0_98, %c0_99] : memref<2x16x128xf32, #tpu.memory_space<vmem>>, vector<1x16x128xf32>
    %277 = vector.shape_cast %276 : vector<1x16x128xf32> to vector<16x128xf32>
    %278 = vector.shape_cast %275 : vector<16x128xf32> to vector<1x16x128xf32>
    tpu.vector_store %arg7[%c0_97, %c0_98, %c0_99], %278 {strides = array<i32>} : memref<2x16x128xf32, #tpu.memory_space<vmem>>, vector<1x16x128xf32>,
    %279 = arith.mulf %225, %196 : vector<16x128xf32>
    %c127_i32_100 = arith.constant 127 : i32
    %280 = tpu.dynamic_rotate %279 by %c127_i32_100 dim 1 : vector<16x128xf32>, i32 -> vector<16x128xf32>
    %281 = arith.mulf %225, %198 : vector<16x128xf32>
    %282 = arith.addf %280, %281 : vector<16x128xf32>
    %283 = arith.mulf %225, %200 : vector<16x128xf32>
    %c1_i32_101 = arith.constant 1 : i32
    %284 = tpu.dynamic_rotate %283 by %c1_i32_101 dim 1 : vector<16x128xf32>, i32 -> vector<16x128xf32>
    %285 = arith.addf %282, %284 : vector<16x128xf32>
    %c15_i32_102 = arith.constant 15 : i32
    %286 = tpu.dynamic_rotate %285 by %c15_i32_102 dim 0 : vector<16x128xf32>, i32 -> vector<16x128xf32>
    %287 = arith.mulf %225, %202 : vector<16x128xf32>
    %c127_i32_103 = arith.constant 127 : i32
    %288 = tpu.dynamic_rotate %287 by %c127_i32_103 dim 1 : vector<16x128xf32>, i32 -> vector<16x128xf32>
    %289 = arith.mulf %225, %204 : vector<16x128xf32>
    %290 = arith.addf %288, %289 : vector<16x128xf32>
    %291 = arith.mulf %225, %206 : vector<16x128xf32>
    %c1_i32_104 = arith.constant 1 : i32
    %292 = tpu.dynamic_rotate %291 by %c1_i32_104 dim 1 : vector<16x128xf32>, i32 -> vector<16x128xf32>
    %293 = arith.addf %290, %292 : vector<16x128xf32>
    %294 = arith.addf %286, %293 : vector<16x128xf32>
    %295 = arith.mulf %225, %208 : vector<16x128xf32>
    %c127_i32_105 = arith.constant 127 : i32
    %296 = tpu.dynamic_rotate %295 by %c127_i32_105 dim 1 : vector<16x128xf32>, i32 -> vector<16x128xf32>
    %297 = arith.mulf %225, %210 : vector<16x128xf32>
    %298 = arith.addf %296, %297 : vector<16x128xf32>
    %299 = arith.mulf %225, %212 : vector<16x128xf32>
    %c1_i32_106 = arith.constant 1 : i32
    %300 = tpu.dynamic_rotate %299 by %c1_i32_106 dim 1 : vector<16x128xf32>, i32 -> vector<16x128xf32>
    %301 = arith.addf %298, %300 : vector<16x128xf32>
    %c1_i32_107 = arith.constant 1 : i32
    %302 = tpu.dynamic_rotate %301 by %c1_i32_107 dim 0 : vector<16x128xf32>, i32 -> vector<16x128xf32>
    %303 = arith.addf %294, %302 : vector<16x128xf32>
    %c1_108 = arith.constant 1 : index
    %c0_109 = arith.constant 0 : index
    %c0_110 = arith.constant 0 : index
    %304 = vector.load %arg7[%c1_108, %c0_109, %c0_110] : memref<2x16x128xf32, #tpu.memory_space<vmem>>, vector<1x16x128xf32>
    %305 = vector.shape_cast %304 : vector<1x16x128xf32> to vector<16x128xf32>
    %306 = vector.shape_cast %303 : vector<16x128xf32> to vector<1x16x128xf32>
    tpu.vector_store %arg7[%c1_108, %c0_109, %c0_110], %306 {strides = array<i32>} : memref<2x16x128xf32, #tpu.memory_space<vmem>>, vector<1x16x128xf32>,
    %307 = vector.shape_cast %3 : vector<16x128xf32> to vector<1x16x128xf32>
    %cst_111 = arith.constant dense<0.000000e+00> : vector<1xf32>
    %308 = vector.multi_reduction <add>, %307, %cst_111 [1, 2] : vector<1x16x128xf32> to vector<1xf32>
    %309 = vector.shape_cast %308 : vector<1xf32> to vector<1x1x1xf32>
    %310 = vector.extract %309[0, 0, 0] : f32 from vector<1x1x1xf32>
    %311 = vector.broadcast %310 : f32 to vector<1x1xf32>
    %312 = vector.shape_cast %250 : vector<16x128xf32> to vector<1x16x128xf32>
    %cst_112 = arith.constant dense<0.000000e+00> : vector<1xf32>
    %313 = vector.multi_reduction <add>, %312, %cst_112 [1, 2] : vector<1x16x128xf32> to vector<1xf32>
    %314 = vector.shape_cast %313 : vector<1xf32> to vector<1x1x1xf32>
    %315 = vector.extract %314[0, 0, 0] : f32 from vector<1x1x1xf32>
    %316 = vector.broadcast %315 : f32 to vector<1x1xf32>
    %cst_113 = arith.constant 1.000000e-10 : f32
    %317 = vector.broadcast %cst_113 : f32 to vector<1x1xf32>
    %318 = arith.addf %316, %317 : vector<1x1xf32>
    %319 = arith.divf %311, %318 : vector<1x1xf32>
    %320 = vector.broadcast %319 : vector<1x1xf32> to vector<16x128xf32>
    %321 = arith.mulf %320, %250 : vector<16x128xf32>
    %c0_114 = arith.constant 0 : index
    %c0_115 = arith.constant 0 : index
    %322 = vector.load %arg5[%c0_114, %c0_115] : memref<16x128xf32, #tpu.memory_space<vmem>>, vector<16x128xf32>
    tpu.vector_store %arg5[%c0_114, %c0_115], %321 {strides = array<i32>} : memref<16x128xf32, #tpu.memory_space<vmem>>, vector<16x128xf32>,
    return
  }
}

</mosaic_0001>

<llo_original>
// kernel: tpu_custom_call.1
$region0: #{tpu_custom_call.1}
  #allocation0 [shape = 'u32[]', space=smem, size = 0x4, offset = 0x4, fixed_abs, tag = 'smem constant byte address 0x4 - core index']
  #allocation1 [shape = 'u32[144,128]{1,0:T(1,128)}', space=vmem, size = 0x12000, scoped, tag = 'internal scratch']
  %s0 = inlined_call_operand.hbm [shape: f32[3], index: 0, kind: input, shape index: {}]
  %s1 = inlined_call_operand.hbm [shape: f32[16,128], index: 1, kind: input, shape index: {}]
  %s2 = inlined_call_operand.hbm [shape: f32[16,128], index: 2, kind: input, shape index: {}]
  %s3 = inlined_call_operand.hbm [shape: f32[2,16,128], index: 3, kind: input, shape index: {}]
  %s4 = inlined_call_operand.hbm [shape: f32[2,16,128], index: 4, kind: input, shape index: {}]
  %s5 = inlined_call_operand.hbm [shape: f32[16,128], index: 5, kind: output, shape index: {0}]
  %s6 = inlined_call_operand.hbm [shape: f32[16,128], index: 6, kind: output, shape index: {1}]
  %s7 = inlined_call_operand.hbm [shape: f32[2,16,128], index: 7, kind: output, shape index: {2}]
  %s8 = inlined_call_operand.hbm [shape: f32[2,16,128], index: 8, kind: output, shape index: {3}]
  %9 = xla_tuple %s5, %s6, %s7, %s8
  %s10 = sld [smem:[#allocation0]]
  $region74: #{tpu_custom_call.1} parent=0
    _
  %s12 = ssub.s32 1, %s10
  %s13 = scalar_select 0, %s12, %s10
  $region1: #{tpu_custom_call.1} parent=0
    #allocation2 [shape = 'u8[512]{0}', space=smem, size = 0x200, scoped, tag = 'input window, operand 0, single buffered']
    #allocation3 [shape = 's32[1]{0}', space=sflag, size = 0x4, scoped, tag = 'scoped memory for tpu_custom_call.1']
    #allocation4 [shape = 's32[1]{0}', space=sflag, size = 0x4, scoped, tag = 'scoped memory for tpu_custom_call.1']
    #allocation5 [shape = 's32[1]{0}', space=sflag, size = 0x4, scoped, tag = 'scoped memory for tpu_custom_call.1']
    #allocation6 [shape = 'u8[8192]{0}', space=vmem, size = 0x2000, scoped, tag = 'input window, operand 1, single buffered']
    #allocation7 [shape = 'u8[8192]{0}', space=vmem, size = 0x2000, scoped, tag = 'input window, operand 2, single buffered']
    #allocation8 [shape = 's32[1]{0}', space=sflag, size = 0x4, scoped, tag = 'scoped memory for tpu_custom_call.1']
    #allocation9 [shape = 'u8[16384]{0}', space=vmem, size = 0x4000, scoped, tag = 'input window, operand 3, single buffered']
    #allocation10 [shape = 'u8[16384]{0}', space=vmem, size = 0x4000, scoped, tag = 'input window, operand 4, single buffered']
    #allocation11 [shape = 's32[1]{0}', space=sflag, size = 0x4, scoped, tag = 'scoped memory for tpu_custom_call.1']
    #allocation12 [shape = 'u8[8192]{0}', space=vmem, size = 0x2000, scoped, tag = 'output window, operand 0, single buffered']
    #allocation13 [shape = 'u8[8192]{0}', space=vmem, size = 0x2000, scoped, tag = 'output window, operand 1, single buffered']
    #allocation14 [shape = 's32[1]{0}', space=sflag, size = 0x4, scoped, tag = 'scoped memory for tpu_custom_call.1']
    #allocation15 [shape = 'u8[16384]{0}', space=vmem, size = 0x4000, scoped, tag = 'output window, operand 2, single buffered']
    #allocation16 [shape = 'u8[16384]{0}', space=vmem, size = 0x4000, scoped, tag = 'output window, operand 3, single buffered']
    #allocation17 [shape = 's32[1]{0}', space=sflag, size = 0x4, scoped, tag = 'scoped memory for tpu_custom_call.1']
    %14 = vsyncpa [#allocation5], 0
    %15 = vsyncpa [#allocation3], 0
    %16 = vsyncpa [#allocation8], 0
    %17 = vsyncpa [#allocation11], 0
    %18 = vsyncpa [#allocation4], 0
    %19 = vsyncpa [#allocation14], 0
    %20 = vsyncpa [#allocation17], 0
    // Predicated region
    $region2: #{tpu_custom_call.1} parent=1 // pred_check
      _
    $region3: #{tpu_custom_call.1} parent=1 // pred_check_branch
      %22 = sbr.rel (0) target = $region5
    $region4: #{tpu_custom_call.1} parent=1 // pred_region
      %s24 = ssub.s32 16, 16
      %25 = vsyncadd [#allocation5], %s24
      %28 = dma.hbm_to_smem %s0, 16, [#allocation2], [#allocation5]
    $region5: #{tpu_custom_call.1} parent=1 // pred_fallthru
      _
    // Predicated region
    $region6: #{tpu_custom_call.1} parent=1 // pred_check
      _
    $region7: #{tpu_custom_call.1} parent=1 // pred_check_branch
      %30 = sbr.rel (0) target = $region9
    $region8: #{tpu_custom_call.1} parent=1 // pred_region
      %s32 = ssub.s32 256, 256
      %33 = vsyncadd [#allocation3], %s32
      %s34 = sshll.u32 [#allocation6], 4
      %s35 = int_to_ptr.vmem [resolvable:$true] %s34
      %40 = dma.hbm_to_vmem [thread:$0]  %s1, 256, %s35, [#allocation3], 128, 128, 8
    $region9: #{tpu_custom_call.1} parent=1 // pred_fallthru
      _
    // Predicated region
    $region10: #{tpu_custom_call.1} parent=1 // pred_check
      _
    $region11: #{tpu_custom_call.1} parent=1 // pred_check_branch
      %42 = sbr.rel (0) target = $region13
    $region12: #{tpu_custom_call.1} parent=1 // pred_region
      %s44 = ssub.s32 256, 256
      %45 = vsyncadd [#allocation8], %s44
      %s46 = sshll.u32 [#allocation7], 4
      %s47 = int_to_ptr.vmem [resolvable:$true] %s46
      %52 = dma.hbm_to_vmem [thread:$0]  %s2, 256, %s47, [#allocation8], 128, 128, 8
    $region13: #{tpu_custom_call.1} parent=1 // pred_fallthru
      _
    // Predicated region
    $region14: #{tpu_custom_call.1} parent=1 // pred_check
      _
    $region15: #{tpu_custom_call.1} parent=1 // pred_check_branch
      %54 = sbr.rel (0) target = $region17
    $region16: #{tpu_custom_call.1} parent=1 // pred_region
      %s56 = ssub.s32 512, 512
      %57 = vsyncadd [#allocation8], %s56
      %s58 = sshll.u32 [#allocation9], 4
      %s59 = int_to_ptr.vmem [resolvable:$true] %s58
      %64 = dma.hbm_to_vmem [thread:$0]  %s3, 512, %s59, [#allocation8], 128, 128, 8
    $region17: #{tpu_custom_call.1} parent=1 // pred_fallthru
      _
    // Predicated region
    $region18: #{tpu_custom_call.1} parent=1 // pred_check
      _
    $region19: #{tpu_custom_call.1} parent=1 // pred_check_branch
      %66 = sbr.rel (0) target = $region21
    $region20: #{tpu_custom_call.1} parent=1 // pred_region
      %s68 = ssub.s32 512, 512
      %69 = vsyncadd [#allocation11], %s68
      %s70 = sshll.u32 [#allocation10], 4
      %s71 = int_to_ptr.vmem [resolvable:$true] %s70
      %76 = dma.hbm_to_vmem [thread:$0]  %s4, 512, %s71, [#allocation11], 128, 128, 8
    $region21: #{tpu_custom_call.1} parent=1 // pred_fallthru
      _
    // Predicated region
    $region22: #{tpu_custom_call.1} parent=1 // pred_check
      _
    $region23: #{tpu_custom_call.1} parent=1 // pred_check_branch
      %78 = sbr.rel (0) target = $region25
    $region24: #{tpu_custom_call.1} parent=1 // pred_region
      %79 = dma.done [#allocation5], 16
    $region25: #{tpu_custom_call.1} parent=1 // pred_fallthru
      _
    // Predicated region
    $region26: #{tpu_custom_call.1} parent=1 // pred_check
      _
    $region27: #{tpu_custom_call.1} parent=1 // pred_check_branch
      %81 = sbr.rel (0) target = $region29
    $region28: #{tpu_custom_call.1} parent=1 // pred_region
      %82 = dma.done [#allocation3], 256
    $region29: #{tpu_custom_call.1} parent=1 // pred_fallthru
      _
    // Predicated region
    $region30: #{tpu_custom_call.1} parent=1 // pred_check
      _
    $region31: #{tpu_custom_call.1} parent=1 // pred_check_branch
      %84 = sbr.rel (0) target = $region33
    $region32: #{tpu_custom_call.1} parent=1 // pred_region
      %85 = dma.done [#allocation8], 256
    $region33: #{tpu_custom_call.1} parent=1 // pred_fallthru
      _
    // Predicated region
    $region34: #{tpu_custom_call.1} parent=1 // pred_check
      _
    $region35: #{tpu_custom_call.1} parent=1 // pred_check_branch
      %87 = sbr.rel (0) target = $region37
    $region36: #{tpu_custom_call.1} parent=1 // pred_region
      %88 = dma.done [#allocation8], 512
    $region37: #{tpu_custom_call.1} parent=1 // pred_fallthru
      _
    // Predicated region
    $region38: #{tpu_custom_call.1} parent=1 // pred_check
      _
    $region39: #{tpu_custom_call.1} parent=1 // pred_check_branch
      %90 = sbr.rel (0) target = $region41
    $region40: #{tpu_custom_call.1} parent=1 // pred_region
      %91 = dma.done [#allocation11], 512
    $region41: #{tpu_custom_call.1} parent=1 // pred_fallthru
      _
    %92 = sfence
    %s93 = sld [smem:[#allocation2]]
    %s94 = sld [smem:[#allocation2 + $0x1]]
    %s95 = sld [smem:[#allocation2 + $0x2]]
    %v96 = vld [vmem:[#allocation6] sm:$0xff]
    %v97 = vld [vmem:[#allocation6 + $0x8] sm:$0xff]
    %v98 = vld [vmem:[#allocation7] sm:$0xff]
    %v99 = vld [vmem:[#allocation7 + $0x8] sm:$0xff]
    %v100 = vld [vmem:[#allocation9] sm:$0xff]
    %v101 = vld [vmem:[#allocation9 + $0x8] sm:$0xff]
    %s102 = scalar_lea.vmem [#allocation9], 16
    %v103 = vld [vmem:[%s102] sm:$0xff]
    %v104 = vld [vmem:[%s102 + $0x8] sm:$0xff]
    %vm105 = vcmp.lt.f32.partialorder %v96, 1e-08
    %vm106 = vcmp.lt.f32.partialorder %v97, 1e-08
    %v107 = vrcp.pop %v96
    %v108 = vmul.f32 1.0, %v107
    %v109 = vrcp.pop %v97
    %v110 = vmul.f32 1.0, %v109
    %v111 = vsel %vm105, 0.0, %v108
    %v112 = vsel %vm106, 0.0, %v110
    %v113 = vadd.f32 %v98, %v96
    %v114 = vadd.f32 %v99, %v97
    %v115 = vrot.slane %v113, 7
    %v116 = vrot.slane %v114, 7
    %v117 = vlaneseq
    %v118 = vshrl.u32 %v117, 7
    %vm119 = vcmp.lt.s32.totalorder %v118, 1
    %v120 = vsel %vm119, %v115, %v116
    %v121 = vsel %vm119, %v116, %v115
    %v122 = vadd.f32 %v113, %v121
    %v123 = vadd.f32 %v114, %v120
    %v124 = vrot.slane %v113, 1
    %v125 = vrot.slane %v114, 1
    %vm126 = vcmp.lt.s32.totalorder %v118, 7
    %v127 = vsel %vm126, %v124, %v125
    %v128 = vsel %vm126, %v125, %v124
    %v129 = vadd.f32 %v122, %v127
    %v130 = vadd.f32 %v123, %v128
    %131 = vrot.lane.b32.xlu0 %v129, 1
    %v132 = vpop.permute.xlu0 %131
    %133 = vrot.lane.b32.xlu0 %v130, 1
    %v134 = vpop.permute.xlu0 %133
    %v135 = vadd.f32 %v129, %v132
    %v136 = vadd.f32 %v130, %v134
    %137 = vrot.lane.b32.xlu0 %v129, 127
    %v138 = vpop.permute.xlu0 %137
    %139 = vrot.lane.b32.xlu0 %v130, 127
    %v140 = vpop.permute.xlu0 %139
    %v141 = vadd.f32 %v135, %v138
    %v142 = vadd.f32 %v136, %v140
    %s143 = ssub.f32 1.0, %s93
    %v144 = vmul.f32 %v141, 0.11111111
    %v145 = vmul.f32 %v142, 0.11111111
    %v146 = vstv %s143
    %v147 = vmul.f32 %v146, %v144
    %v148 = vmul.f32 %v146, %v145
    %149 = vst [vmem:[#allocation13] sm:$0xff] %v147
    %150 = vst [vmem:[#allocation13 + $0x8] sm:$0xff] %v148
    %v151 = vmul.f32 %v100, %v111
    %v152 = vmul.f32 %v101, %v112
    %v153 = vmul.f32 %v103, %v111
    %v154 = vmul.f32 %v104, %v112
    %v155 = vmul.f32 %v96, 5.0
    %v156 = vmul.f32 %v97, 5.0
    %v157 = vsub.f32 %v147, %v155
    %v158 = vsub.f32 %v148, %v156
    %v159 = vrot.slane %v157, 7
    %v160 = vrot.slane %v158, 7
    %v161 = vsel %vm119, %v159, %v160
    %v162 = vsel %vm119, %v160, %v159
    %v163 = vrot.slane %v157, 1
    %v164 = vrot.slane %v158, 1
    %v165 = vsel %vm126, %v163, %v164
    %v166 = vsel %vm126, %v164, %v163
    %167 = vrot.lane.b32.xlu0 %v157, 1
    %v168 = vpop.permute.xlu0 %167
    %169 = vrot.lane.b32.xlu0 %v158, 1
    %v170 = vpop.permute.xlu0 %169
    %171 = vrot.lane.b32.xlu0 %v157, 127
    %v172 = vpop.permute.xlu0 %171
    %173 = vrot.lane.b32.xlu0 %v158, 127
    %v174 = vpop.permute.xlu0 %173
    %v175 = vadd.f32 %v162, %v165
    %v176 = vadd.f32 %v161, %v166
    %v177 = vmul.f32 %v175, 0.14644662
    %v178 = vmul.f32 %v176, 0.14644662
    %v179 = vmul.f32 %v157, 0.20710678
    %v180 = vmul.f32 %v158, 0.20710678
    %v181 = vadd.f32 %v177, %v179
    %v182 = vadd.f32 %v178, %v180
    %v183 = vadd.f32 %v168, %v172
    %v184 = vadd.f32 %v170, %v174
    %v185 = vmul.f32 %v183, 0.14644662
    %v186 = vmul.f32 %v184, 0.14644662
    %v187 = vadd.f32 %v185, %v179
    %v188 = vadd.f32 %v186, %v180
    %189 = vrot.lane.b32.xlu0 %v181, 1
    %v190 = vpop.permute.xlu0 %189
    %191 = vrot.lane.b32.xlu0 %v182, 1
    %v192 = vpop.permute.xlu0 %191
    %193 = vrot.lane.b32.xlu0 %v181, 127
    %v194 = vpop.permute.xlu0 %193
    %195 = vrot.lane.b32.xlu0 %v182, 127
    %v196 = vpop.permute.xlu0 %195
    %v197 = vsub.f32 0.0, %v194
    %v198 = vsub.f32 0.0, %v196
    %v199 = vrot.slane %v187, 7
    %v200 = vrot.slane %v188, 7
    %v201 = vsel %vm119, %v199, %v200
    %v202 = vsel %vm119, %v200, %v199
    %v203 = vrot.slane %v187, 1
    %v204 = vrot.slane %v188, 1
    %v205 = vsel %vm126, %v203, %v204
    %v206 = vsel %vm126, %v204, %v203
    %v207 = vsub.f32 0.0, %v205
    %v208 = vsub.f32 0.0, %v206
    %vm209 = vcmp.gt.f32.partialorder %v151, 0.0
    %vm210 = vcmp.gt.f32.partialorder %v152, 0.0
    %vm211 = vcmp.lt.f32.partialorder %v151, 0.0
    %vm212 = vcmp.lt.f32.partialorder %v152, 0.0
    %v213 = vsel %vm211, %v197, 0.0
    %v214 = vsel %vm212, %v198, 0.0
    %v215 = vsel %vm209, %v190, %v213
    %v216 = vsel %vm210, %v192, %v214
    %v217 = vmul.f32 %v151, 0.9
    %v218 = vmul.f32 %v152, 0.9
    %v219 = vsub.f32 %v215, %v217
    %v220 = vsub.f32 %v216, %v218
    %v221 = vld [vmem:[#allocation10] sm:$0xff]
    %v222 = vld [vmem:[#allocation10 + $0x8] sm:$0xff]
    %v223 = vmul.f32 %v221, 3.0
    %v224 = vmul.f32 %v222, 3.0
    %v225 = vadd.f32 %v219, %v223
    %v226 = vadd.f32 %v220, %v224
    %vm227 = vcmp.gt.f32.partialorder %v153, 0.0
    %vm228 = vcmp.gt.f32.partialorder %v154, 0.0
    %vm229 = vcmp.lt.f32.partialorder %v153, 0.0
    %vm230 = vcmp.lt.f32.partialorder %v154, 0.0
    %v231 = vsel %vm229, %v207, 0.0
    %v232 = vsel %vm230, %v208, 0.0
    %v233 = vsel %vm227, %v202, %v231
    %v234 = vsel %vm228, %v201, %v232
    %v235 = vmul.f32 %v153, 0.9
    %v236 = vmul.f32 %v154, 0.9
    %v237 = vsub.f32 %v233, %v235
    %v238 = vsub.f32 %v234, %v236
    %s239 = scalar_lea.vmem [#allocation10], 16
    %v240 = vld [vmem:[%s239] sm:$0xff]
    %v241 = vld [vmem:[%s239 + $0x8] sm:$0xff]
    %v242 = vmul.f32 %v240, 3.0
    %v243 = vmul.f32 %v241, 3.0
    %v244 = vadd.f32 %v237, %v242
    %v245 = vadd.f32 %v238, %v243
    %246 = vst [vmem:[#allocation16] sm:$0xff] %v225
    %247 = vst [vmem:[#allocation16 + $0x8] sm:$0xff] %v226
    %s248 = scalar_lea.vmem [#allocation16], 16
    %249 = vst [vmem:[%s248] sm:$0xff] %v244
    %250 = vst [vmem:[%s248 + $0x8] sm:$0xff] %v245
    %v251 = vstv %s94
    %v252 = vmul.f32 %v225, %v251
    %v253 = vmul.f32 %v226, %v251
    %v254 = vadd.f32 %v100, %v252
    %v255 = vadd.f32 %v101, %v253
    %v256 = vsel %vm105, 0.0, %v254
    %v257 = vsel %vm106, 0.0, %v255
    %v258 = vmul.f32 %v244, %v251
    %v259 = vmul.f32 %v245, %v251
    %v260 = vadd.f32 %v103, %v258
    %v261 = vadd.f32 %v104, %v259
    %v262 = vsel %vm105, 0.0, %v260
    %v263 = vsel %vm106, 0.0, %v261
    %v264 = vmul.f32 %v256, %v256
    %v265 = vmul.f32 %v257, %v257
    %v266 = vmul.f32 %v262, %v262
    %v267 = vmul.f32 %v263, %v263
    %v268 = vadd.f32 %v264, %v266
    %v269 = vadd.f32 %v265, %v267
    %v270 = vrsqrt.pop %v268
    %v271 = vmul.f32 %v268, %v270
    %vm272 = vcmp.eq.f32.partialorder %v268, inf
    %v273 = vsel %vm272, %v268, %v271
    %vm274 = vcmp.eq.f32.partialorder %v268, 0.0
    %v275 = vand.u32 %v268, 2147483648
    %v276 = vsel %vm274, %v275, %v273
    %v277 = vrsqrt.pop %v269
    %v278 = vmul.f32 %v269, %v277
    %vm279 = vcmp.eq.f32.partialorder %v269, inf
    %v280 = vsel %vm279, %v269, %v278
    %vm281 = vcmp.eq.f32.partialorder %v269, 0.0
    %v282 = vand.u32 %v269, 2147483648
    %v283 = vsel %vm281, %v282, %v280
    %vm284 = vcmp.gt.f32.partialorder %v276, %v155
    %vm285 = vcmp.gt.f32.partialorder %v283, %v156
    %v286 = vrsqrt.pop %v268
    %v287 = vrsqrt.pop %v269
    %v288 = vmul.f32 %v286, 5.0
    %v289 = vmul.f32 %v287, 5.0
    %v290 = vsel %vm284, %v288, 1.0
    %v291 = vsel %vm285, %v289, 1.0
    %v292 = vmul.f32 %v256, %v290
    %v293 = vmul.f32 %v257, %v291
    %v294 = vmul.f32 %v262, %v290
    %v295 = vmul.f32 %v263, %v291
    %v296 = vmul.f32 %v292, %v111
    %v297 = vmul.f32 %v293, %v112
    %v298 = vmul.f32 %v294, %v111
    %v299 = vmul.f32 %v295, %v112
    %v300 = vmul.f32 %v296, 0.70710677
    %v301 = vmul.f32 %v297, 0.70710677
    %v302 = vmul.f32 %v298, 0.70710677
    %v303 = vmul.f32 %v299, 0.70710677
    %v304 = vadd.f32 %v300, %v302
    %v305 = vadd.f32 %v301, %v303
    %v306 = vsub.f32 %v300, %v302
    %v307 = vsub.f32 %v301, %v303
    %v308 = vsub.f32 0.0, %v306
    %v309 = vsub.f32 0.0, %v307
    %v310 = vsub.f32 0.0, %v296
    %v311 = vsub.f32 0.0, %v297
    %v312 = vsub.f32 0.0, %v298
    %v313 = vsub.f32 0.0, %v299
    %v314 = vsub.f32 0.0, %v304
    %v315 = vsub.f32 0.0, %v305
    %vm316 = vcmp.gt.f32.partialorder %v304, 0.0
    %vm317 = vcmp.gt.f32.partialorder %v305, 0.0
    %v318 = vsel %vm316, %v304, 1e-10
    %v319 = vsel %vm317, %v305, 1e-10
    %v320 = vstv %s95
    %v321 = vmul.f32 %v318, %v320
    %v322 = vmul.f32 %v319, %v320
    %vm323 = vcmp.gt.f32.partialorder %v298, 0.0
    %vm324 = vcmp.gt.f32.partialorder %v299, 0.0
    %v325 = vsel %vm323, %v298, 1e-10
    %v326 = vsel %vm324, %v299, 1e-10
    %v327 = vmul.f32 %v325, %v320
    %v328 = vmul.f32 %v326, %v320
    %vm329 = vcmp.gt.f32.partialorder %v308, 0.0
    %vm330 = vcmp.gt.f32.partialorder %v309, 0.0
    %v331 = vsel %vm329, %v308, 1e-10
    %v332 = vsel %vm330, %v309, 1e-10
    %v333 = vmul.f32 %v331, %v320
    %v334 = vmul.f32 %v332, %v320
    %vm335 = vcmp.gt.f32.partialorder %v296, 0.0
    %vm336 = vcmp.gt.f32.partialorder %v297, 0.0
    %v337 = vsel %vm335, %v296, 1e-10
    %v338 = vsel %vm336, %v297, 1e-10
    %v339 = vmul.f32 %v337, %v320
    %v340 = vmul.f32 %v338, %v320
    %vm341 = vcmp.gt.f32.partialorder 0.0, 0.0
    %v342 = vsel %vm341, 0.0, 1e-10
    %v343 = vmul.f32 %v342, %v320
    %vm344 = vcmp.gt.f32.partialorder %v310, 0.0
    %vm345 = vcmp.gt.f32.partialorder %v311, 0.0
    %v346 = vsel %vm344, %v310, 1e-10
    %v347 = vsel %vm345, %v311, 1e-10
    %v348 = vmul.f32 %v346, %v320
    %v349 = vmul.f32 %v347, %v320
    %vm350 = vcmp.gt.f32.partialorder %v306, 0.0
    %vm351 = vcmp.gt.f32.partialorder %v307, 0.0
    %v352 = vsel %vm350, %v306, 1e-10
    %v353 = vsel %vm351, %v307, 1e-10
    %v354 = vmul.f32 %v352, %v320
    %v355 = vmul.f32 %v353, %v320
    %vm356 = vcmp.gt.f32.partialorder %v312, 0.0
    %vm357 = vcmp.gt.f32.partialorder %v313, 0.0
    %v358 = vsel %vm356, %v312, 1e-10
    %v359 = vsel %vm357, %v313, 1e-10
    %v360 = vmul.f32 %v358, %v320
    %v361 = vmul.f32 %v359, %v320
    %vm362 = vcmp.gt.f32.partialorder %v314, 0.0
    %vm363 = vcmp.gt.f32.partialorder %v315, 0.0
    %v364 = vsel %vm362, %v314, 1e-10
    %v365 = vsel %vm363, %v315, 1e-10
    %v366 = vmul.f32 %v364, %v320
    %v367 = vmul.f32 %v365, %v320
    %v368 = vmax.f32 %v321, %v327
    %v369 = vmax.f32 %v322, %v328
    %v370 = vmax.f32 %v368, %v333
    %v371 = vmax.f32 %v369, %v334
    %v372 = vmax.f32 %v370, %v339
    %v373 = vmax.f32 %v371, %v340
    %v374 = vmax.f32 %v372, %v343
    %v375 = vmax.f32 %v373, %v343
    %v376 = vmax.f32 %v374, %v348
    %v377 = vmax.f32 %v375, %v349
    %v378 = vmax.f32 %v376, %v354
    %v379 = vmax.f32 %v377, %v355
    %v380 = vmax.f32 %v378, %v360
    %v381 = vmax.f32 %v379, %v361
    %v382 = vmax.f32 %v380, %v366
    %v383 = vmax.f32 %v381, %v367
    %v384 = vsub.f32 %v321, %v382
    %v385 = vsub.f32 %v322, %v383
    %v386 = vmul.f32 %v384, 1.442695
    %v387 = vpow.pop %v386
    %v388 = vmul.f32 %v385, 1.442695
    %v389 = vpow.pop %v388
    %v390 = vsub.f32 %v327, %v382
    %v391 = vsub.f32 %v328, %v383
    %v392 = vmul.f32 %v390, 1.442695
    %v393 = vpow.pop %v392
    %v394 = vmul.f32 %v391, 1.442695
    %v395 = vpow.pop %v394
    %v396 = vsub.f32 %v333, %v382
    %v397 = vsub.f32 %v334, %v383
    %v398 = vmul.f32 %v396, 1.442695
    %v399 = vpow.pop %v398
    %v400 = vmul.f32 %v397, 1.442695
    %v401 = vpow.pop %v400
    %v402 = vsub.f32 %v339, %v382
    %v403 = vsub.f32 %v340, %v383
    %v404 = vmul.f32 %v402, 1.442695
    %v405 = vpow.pop %v404
    %v406 = vmul.f32 %v403, 1.442695
    %v407 = vpow.pop %v406
    %v408 = vsub.f32 %v343, %v382
    %v409 = vsub.f32 %v343, %v383
    %v410 = vmul.f32 %v408, 1.442695
    %v411 = vpow.pop %v410
    %v412 = vmul.f32 %v409, 1.442695
    %v413 = vpow.pop %v412
    %v414 = vsub.f32 %v348, %v382
    %v415 = vsub.f32 %v349, %v383
    %v416 = vmul.f32 %v414, 1.442695
    %v417 = vpow.pop %v416
    %v418 = vmul.f32 %v415, 1.442695
    %v419 = vpow.pop %v418
    %v420 = vsub.f32 %v354, %v382
    %v421 = vsub.f32 %v355, %v383
    %v422 = vmul.f32 %v420, 1.442695
    %v423 = vpow.pop %v422
    %v424 = vmul.f32 %v421, 1.442695
    %v425 = vpow.pop %v424
    %v426 = vsub.f32 %v360, %v382
    %v427 = vsub.f32 %v361, %v383
    %v428 = vmul.f32 %v426, 1.442695
    %v429 = vpow.pop %v428
    %v430 = vmul.f32 %v427, 1.442695
    %v431 = vpow.pop %v430
    %v432 = vsub.f32 %v366, %v382
    %v433 = vsub.f32 %v367, %v383
    %v434 = vmul.f32 %v432, 1.442695
    %v435 = vpow.pop %v434
    %v436 = vmul.f32 %v433, 1.442695
    %v437 = vpow.pop %v436
    %v438 = vadd.f32 %v387, %v393
    %v439 = vadd.f32 %v389, %v395
    %v440 = vadd.f32 %v438, %v399
    %v441 = vadd.f32 %v439, %v401
    %v442 = vadd.f32 %v440, %v405
    %v443 = vadd.f32 %v441, %v407
    %v444 = vadd.f32 %v442, %v411
    %v445 = vadd.f32 %v443, %v413
    %v446 = vadd.f32 %v444, %v417
    %v447 = vadd.f32 %v445, %v419
    %v448 = vadd.f32 %v446, %v423
    %v449 = vadd.f32 %v447, %v425
    %v450 = vadd.f32 %v448, %v429
    %v451 = vadd.f32 %v449, %v431
    %v452 = vadd.f32 %v450, %v435
    %v453 = vadd.f32 %v451, %v437
    %v454 = vrcp.pop %v452
    %v455 = vmul.f32 1.0, %v454
    %v456 = vrcp.pop %v453
    %v457 = vmul.f32 1.0, %v456
    %v458 = vmul.f32 %v96, %v455
    %v459 = vmul.f32 %v97, %v457
    %v460 = vmul.f32 %v292, %v455
    %v461 = vmul.f32 %v293, %v457
    %v462 = vmul.f32 %v294, %v455
    %v463 = vmul.f32 %v295, %v457
    %v464 = vmul.f32 %v458, %v387
    %v465 = vmul.f32 %v459, %v389
    %466 = vrot.lane.b32.xlu0 %v464, 127
    %v467 = vpop.permute.xlu0 %466
    %468 = vrot.lane.b32.xlu0 %v465, 127
    %v469 = vpop.permute.xlu0 %468
    %v470 = vmul.f32 %v458, %v393
    %v471 = vmul.f32 %v459, %v395
    %v472 = vadd.f32 %v467, %v470
    %v473 = vadd.f32 %v469, %v471
    %v474 = vmul.f32 %v458, %v399
    %v475 = vmul.f32 %v459, %v401
    %476 = vrot.lane.b32.xlu0 %v474, 1
    %v477 = vpop.permute.xlu0 %476
    %478 = vrot.lane.b32.xlu0 %v475, 1
    %v479 = vpop.permute.xlu0 %478
    %v480 = vadd.f32 %v472, %v477
    %v481 = vadd.f32 %v473, %v479
    %v482 = vrot.slane %v480, 1
    %v483 = vrot.slane %v481, 1
    %v484 = vsel %vm126, %v482, %v483
    %v485 = vsel %vm126, %v483, %v482
    %v486 = vmul.f32 %v458, %v405
    %v487 = vmul.f32 %v459, %v407
    %488 = vrot.lane.b32.xlu0 %v486, 127
    %v489 = vpop.permute.xlu0 %488
    %490 = vrot.lane.b32.xlu0 %v487, 127
    %v491 = vpop.permute.xlu0 %490
    %v492 = vmul.f32 %v458, %v411
    %v493 = vmul.f32 %v459, %v413
    %v494 = vadd.f32 %v489, %v492
    %v495 = vadd.f32 %v491, %v493
    %v496 = vmul.f32 %v458, %v417
    %v497 = vmul.f32 %v459, %v419
    %498 = vrot.lane.b32.xlu0 %v496, 1
    %v499 = vpop.permute.xlu0 %498
    %500 = vrot.lane.b32.xlu0 %v497, 1
    %v501 = vpop.permute.xlu0 %500
    %v502 = vadd.f32 %v494, %v499
    %v503 = vadd.f32 %v495, %v501
    %v504 = vadd.f32 %v484, %v502
    %v505 = vadd.f32 %v485, %v503
    %v506 = vmul.f32 %v458, %v423
    %v507 = vmul.f32 %v459, %v425
    %508 = vrot.lane.b32.xlu0 %v506, 127
    %v509 = vpop.permute.xlu0 %508
    %510 = vrot.lane.b32.xlu0 %v507, 127
    %v511 = vpop.permute.xlu0 %510
    %v512 = vmul.f32 %v458, %v429
    %v513 = vmul.f32 %v459, %v431
    %v514 = vadd.f32 %v509, %v512
    %v515 = vadd.f32 %v511, %v513
    %v516 = vmul.f32 %v458, %v435
    %v517 = vmul.f32 %v459, %v437
    %518 = vrot.lane.b32.xlu0 %v516, 1
    %v519 = vpop.permute.xlu0 %518
    %520 = vrot.lane.b32.xlu0 %v517, 1
    %v521 = vpop.permute.xlu0 %520
    %v522 = vadd.f32 %v514, %v519
    %v523 = vadd.f32 %v515, %v521
    %v524 = vrot.slane %v522, 7
    %v525 = vrot.slane %v523, 7
    %v526 = vsel %vm119, %v524, %v525
    %v527 = vsel %vm119, %v525, %v524
    %v528 = vadd.f32 %v504, %v527
    %v529 = vadd.f32 %v505, %v526
    %v530 = vmul.f32 %v460, %v387
    %v531 = vmul.f32 %v461, %v389
    %532 = vrot.lane.b32.xlu0 %v530, 127
    %v533 = vpop.permute.xlu0 %532
    %534 = vrot.lane.b32.xlu0 %v531, 127
    %v535 = vpop.permute.xlu0 %534
    %v536 = vmul.f32 %v460, %v393
    %v537 = vmul.f32 %v461, %v395
    %v538 = vadd.f32 %v533, %v536
    %v539 = vadd.f32 %v535, %v537
    %v540 = vmul.f32 %v460, %v399
    %v541 = vmul.f32 %v461, %v401
    %542 = vrot.lane.b32.xlu0 %v540, 1
    %v543 = vpop.permute.xlu0 %542
    %544 = vrot.lane.b32.xlu0 %v541, 1
    %v545 = vpop.permute.xlu0 %544
    %v546 = vadd.f32 %v538, %v543
    %v547 = vadd.f32 %v539, %v545
    %v548 = vrot.slane %v546, 1
    %v549 = vrot.slane %v547, 1
    %v550 = vsel %vm126, %v548, %v549
    %v551 = vsel %vm126, %v549, %v548
    %v552 = vmul.f32 %v460, %v405
    %v553 = vmul.f32 %v461, %v407
    %554 = vrot.lane.b32.xlu0 %v552, 127
    %v555 = vpop.permute.xlu0 %554
    %556 = vrot.lane.b32.xlu0 %v553, 127
    %v557 = vpop.permute.xlu0 %556
    %v558 = vmul.f32 %v460, %v411
    %v559 = vmul.f32 %v461, %v413
    %v560 = vadd.f32 %v555, %v558
    %v561 = vadd.f32 %v557, %v559
    %v562 = vmul.f32 %v460, %v417
    %v563 = vmul.f32 %v461, %v419
    %564 = vrot.lane.b32.xlu0 %v562, 1
    %v565 = vpop.permute.xlu0 %564
    %566 = vrot.lane.b32.xlu0 %v563, 1
    %v567 = vpop.permute.xlu0 %566
    %v568 = vadd.f32 %v560, %v565
    %v569 = vadd.f32 %v561, %v567
    %v570 = vadd.f32 %v550, %v568
    %v571 = vadd.f32 %v551, %v569
    %v572 = vmul.f32 %v460, %v423
    %v573 = vmul.f32 %v461, %v425
    %574 = vrot.lane.b32.xlu0 %v572, 127
    %v575 = vpop.permute.xlu0 %574
    %576 = vrot.lane.b32.xlu0 %v573, 127
    %v577 = vpop.permute.xlu0 %576
    %v578 = vmul.f32 %v460, %v429
    %v579 = vmul.f32 %v461, %v431
    %v580 = vadd.f32 %v575, %v578
    %v581 = vadd.f32 %v577, %v579
    %v582 = vmul.f32 %v460, %v435
    %v583 = vmul.f32 %v461, %v437
    %584 = vrot.lane.b32.xlu0 %v582, 1
    %v585 = vpop.permute.xlu0 %584
    %586 = vrot.lane.b32.xlu0 %v583, 1
    %v587 = vpop.permute.xlu0 %586
    %v588 = vadd.f32 %v580, %v585
    %v589 = vadd.f32 %v581, %v587
    %v590 = vrot.slane %v588, 7
    %v591 = vrot.slane %v589, 7
    %v592 = vsel %vm119, %v590, %v591
    %v593 = vsel %vm119, %v591, %v590
    %v594 = vadd.f32 %v570, %v593
    %v595 = vadd.f32 %v571, %v592
    %596 = vst [vmem:[#allocation15] sm:$0xff] %v594
    %597 = vst [vmem:[#allocation15 + $0x8] sm:$0xff] %v595
    %v598 = vmul.f32 %v462, %v387
    %v599 = vmul.f32 %v463, %v389
    %600 = vrot.lane.b32.xlu0 %v598, 127
    %v601 = vpop.permute.xlu0 %600
    %602 = vrot.lane.b32.xlu0 %v599, 127
    %v603 = vpop.permute.xlu0 %602
    %v604 = vmul.f32 %v462, %v393
    %v605 = vmul.f32 %v463, %v395
    %v606 = vadd.f32 %v601, %v604
    %v607 = vadd.f32 %v603, %v605
    %v608 = vmul.f32 %v462, %v399
    %v609 = vmul.f32 %v463, %v401
    %610 = vrot.lane.b32.xlu0 %v608, 1
    %v611 = vpop.permute.xlu0 %610
    %612 = vrot.lane.b32.xlu0 %v609, 1
    %v613 = vpop.permute.xlu0 %612
    %v614 = vadd.f32 %v606, %v611
    %v615 = vadd.f32 %v607, %v613
    %v616 = vrot.slane %v614, 1
    %v617 = vrot.slane %v615, 1
    %v618 = vsel %vm126, %v616, %v617
    %v619 = vsel %vm126, %v617, %v616
    %v620 = vmul.f32 %v462, %v405
    %v621 = vmul.f32 %v463, %v407
    %622 = vrot.lane.b32.xlu0 %v620, 127
    %v623 = vpop.permute.xlu0 %622
    %624 = vrot.lane.b32.xlu0 %v621, 127
    %v625 = vpop.permute.xlu0 %624
    %v626 = vmul.f32 %v462, %v411
    %v627 = vmul.f32 %v463, %v413
    %v628 = vadd.f32 %v623, %v626
    %v629 = vadd.f32 %v625, %v627
    %v630 = vmul.f32 %v462, %v417
    %v631 = vmul.f32 %v463, %v419
    %632 = vrot.lane.b32.xlu0 %v630, 1
    %v633 = vpop.permute.xlu0 %632
    %634 = vrot.lane.b32.xlu0 %v631, 1
    %v635 = vpop.permute.xlu0 %634
    %v636 = vadd.f32 %v628, %v633
    %v637 = vadd.f32 %v629, %v635
    %v638 = vadd.f32 %v618, %v636
    %v639 = vadd.f32 %v619, %v637
    %v640 = vmul.f32 %v462, %v423
    %v641 = vmul.f32 %v463, %v425
    %642 = vrot.lane.b32.xlu0 %v640, 127
    %v643 = vpop.permute.xlu0 %642
    %644 = vrot.lane.b32.xlu0 %v641, 127
    %v645 = vpop.permute.xlu0 %644
    %v646 = vmul.f32 %v462, %v429
    %v647 = vmul.f32 %v463, %v431
    %v648 = vadd.f32 %v643, %v646
    %v649 = vadd.f32 %v645, %v647
    %v650 = vmul.f32 %v462, %v435
    %v651 = vmul.f32 %v463, %v437
    %652 = vrot.lane.b32.xlu0 %v650, 1
    %v653 = vpop.permute.xlu0 %652
    %654 = vrot.lane.b32.xlu0 %v651, 1
    %v655 = vpop.permute.xlu0 %654
    %v656 = vadd.f32 %v648, %v653
    %v657 = vadd.f32 %v649, %v655
    %v658 = vrot.slane %v656, 7
    %v659 = vrot.slane %v657, 7
    %v660 = vsel %vm119, %v658, %v659
    %v661 = vsel %vm119, %v659, %v658
    %v662 = vadd.f32 %v638, %v661
    %v663 = vadd.f32 %v639, %v660
    %s664 = scalar_lea.vmem [#allocation15], 16
    %665 = vst [vmem:[%s664] sm:$0xff] %v662
    %666 = vst [vmem:[%s664 + $0x8] sm:$0xff] %v663
    %v667 = vadd.f32 %v96, %v97
    %668 = vadd.xlane.f32.xlu0 %v667
    %v669 = vpop.xlane.xlu0 %668
    %v670 = vrot.slane %v669, 4
    %v671 = vadd.f32 %v669, %v670
    %v672 = vrot.slane %v671, 2
    %v673 = vadd.f32 %v671, %v672
    %v674 = vrot.slane %v673, 1
    %v675 = vadd.f32 %v673, %v674
    %s676 = vtos %v675
    %v677 = vstv %s676
    %v678 = vadd.f32 %v528, %v529
    %679 = vadd.xlane.f32.xlu0 %v678
    %v680 = vpop.xlane.xlu0 %679
    %v681 = vrot.slane %v680, 4
    %v682 = vadd.f32 %v680, %v681
    %v683 = vrot.slane %v682, 2
    %v684 = vadd.f32 %v682, %v683
    %v685 = vrot.slane %v684, 1
    %v686 = vadd.f32 %v684, %v685
    %s687 = vtos %v686
    %v688 = vstv %s687
    %v689 = vadd.f32 %v688, 1e-10
    %v690 = vrcp.pop %v689
    %v691 = vmul.f32 %v677, %v690
    %v692 = vmul.f32 %v691, %v528
    %v693 = vmul.f32 %v691, %v529
    %694 = vst [vmem:[#allocation12] sm:$0xff] %v692
    %695 = vst [vmem:[#allocation12 + $0x8] sm:$0xff] %v693
    // Predicated region
    $region42: #{tpu_custom_call.1} parent=1 // pred_check
      _
    $region43: #{tpu_custom_call.1} parent=1 // pred_check_branch
      %697 = sbr.rel (0) target = $region45
    $region44: #{tpu_custom_call.1} parent=1 // pred_region
      %s699 = ssub.s32 256, 256
      %700 = vsyncadd [#allocation4], %s699
      %s701 = sshll.u32 [#allocation12], 4
      %s702 = int_to_ptr.vmem [resolvable:$true] %s701
      %707 = dma.vmem_to_hbm [thread:$0]  %s702, 256, %s5, [#allocation4], 128, 128, 8
    $region45: #{tpu_custom_call.1} parent=1 // pred_fallthru
      _
    // Predicated region
    $region46: #{tpu_custom_call.1} parent=1 // pred_check
      _
    $region47: #{tpu_custom_call.1} parent=1 // pred_check_branch
      %709 = sbr.rel (0) target = $region49
    $region48: #{tpu_custom_call.1} parent=1 // pred_region
      %s711 = ssub.s32 256, 256
      %712 = vsyncadd [#allocation14], %s711
      %s713 = sshll.u32 [#allocation13], 4
      %s714 = int_to_ptr.vmem [resolvable:$true] %s713
      %719 = dma.vmem_to_hbm [thread:$0]  %s714, 256, %s6, [#allocation14], 128, 128, 8
    $region49: #{tpu_custom_call.1} parent=1 // pred_fallthru
      _
    // Predicated region
    $region50: #{tpu_custom_call.1} parent=1 // pred_check
      _
    $region51: #{tpu_custom_call.1} parent=1 // pred_check_branch
      %721 = sbr.rel (0) target = $region53
    $region52: #{tpu_custom_call.1} parent=1 // pred_region
      %s723 = ssub.s32 512, 512
      %724 = vsyncadd [#allocation14], %s723
      %s725 = sshll.u32 [#allocation15], 4
      %s726 = int_to_ptr.vmem [resolvable:$true] %s725
      %731 = dma.vmem_to_hbm [thread:$0]  %s726, 512, %s7, [#allocation14], 128, 128, 8
    $region53: #{tpu_custom_call.1} parent=1 // pred_fallthru
      _
    // Predicated region
    $region54: #{tpu_custom_call.1} parent=1 // pred_check
      _
    $region55: #{tpu_custom_call.1} parent=1 // pred_check_branch
      %733 = sbr.rel (0) target = $region57
    $region56: #{tpu_custom_call.1} parent=1 // pred_region
      %s735 = ssub.s32 512, 512
      %736 = vsyncadd [#allocation17], %s735
      %s737 = sshll.u32 [#allocation16], 4
      %s738 = int_to_ptr.vmem [resolvable:$true] %s737
      %743 = dma.vmem_to_hbm [thread:$0]  %s738, 512, %s8, [#allocation17], 128, 128, 8
    $region57: #{tpu_custom_call.1} parent=1 // pred_fallthru
      _
    // Predicated region
    $region58: #{tpu_custom_call.1} parent=1 // pred_check
      _
    $region59: #{tpu_custom_call.1} parent=1 // pred_check_branch
      %745 = sbr.rel (0) target = $region61
    $region60: #{tpu_custom_call.1} parent=1 // pred_region
      %746 = dma.done [#allocation4], 256
    $region61: #{tpu_custom_call.1} parent=1 // pred_fallthru
      _
    // Predicated region
    $region62: #{tpu_custom_call.1} parent=1 // pred_check
      _
    $region63: #{tpu_custom_call.1} parent=1 // pred_check_branch
      %748 = sbr.rel (0) target = $region65
    $region64: #{tpu_custom_call.1} parent=1 // pred_region
      %749 = dma.done [#allocation14], 256
    $region65: #{tpu_custom_call.1} parent=1 // pred_fallthru
      _
    // Predicated region
    $region66: #{tpu_custom_call.1} parent=1 // pred_check
      _
    $region67: #{tpu_custom_call.1} parent=1 // pred_check_branch
      %751 = sbr.rel (0) target = $region69
    $region68: #{tpu_custom_call.1} parent=1 // pred_region
      %752 = dma.done [#allocation14], 512
    $region69: #{tpu_custom_call.1} parent=1 // pred_fallthru
      _
    // Predicated region
    $region70: #{tpu_custom_call.1} parent=1 // pred_check
      _
    $region71: #{tpu_custom_call.1} parent=1 // pred_check_branch
      %754 = sbr.rel (0) target = $region73
    $region72: #{tpu_custom_call.1} parent=1 // pred_region
      %755 = dma.done [#allocation17], 512
    $region73: #{tpu_custom_call.1} parent=1 // pred_fallthru
      _
    %756 = vsyncpa [#allocation3], 1
    %757 = vsyncpa [#allocation8], 1
    %758 = vsyncpa [#allocation11], 1
    %759 = vsyncpa [#allocation4], 1
    %760 = vsyncpa [#allocation14], 1
    %761 = vsyncpa [#allocation17], 1
    %762 = vsyncpa [#allocation5], 1

</llo_original>
